<compile_context>
chip_gen: v7x
topology: tpu7x:2x2x1
jax: 0.10.0
libtpu: 0.0.40
codegen_flags: <defaults>
</compile_context>

<pallas_src>
import jax
import jax.numpy as jnp
from jax.experimental import pallas as pl
from jax.experimental.pallas import tpu as pltpu


def _relu_kernel(x_ref, o_ref):
    # Single VPU max per vreg; `0` is weakly typed so no dtype round-trip.
    o_ref[...] = jnp.maximum(x_ref[...], 0)


@jax.jit
def relu_pallas(x):
    """ReLU over an NCHW tensor using a single-block, lane-dense Pallas kernel.

    The tensor is viewed as a 2D (N*C, H*W) slab so the last (lane) dimension
    is large (H*W), then reshaped back. Elementwise, so layout-agnostic.
    """
    n, c, h, w = x.shape
    x2d = x.reshape(n * c, h * w)  # lane-dense: last dim = H*W (e.g. 784)

    out2d = pl.pallas_call(
        _relu_kernel,
        out_shape=jax.ShapeDtypeStruct(x2d.shape, x2d.dtype),
        grid=(1,),
        in_specs=[pl.BlockSpec(x2d.shape, lambda i: (0, 0))],
        out_specs=pl.BlockSpec(x2d.shape, lambda i: (0, 0)),
        input_output_aliases={0: 0},  # ReLU is safely in-place
        compiler_params=pltpu.CompilerParams(
            dimension_semantics=("arbitrary",)
        ),
    )(x2d)

    return out2d.reshape(n, c, h, w)


if __name__ == "__main__":
    key = jax.random.PRNGKey(0)
    # Shape implied by the PyTorch module: [1, 122, 28, 28]
    x77 = jax.random.normal(key, (1, 122, 28, 28), dtype=jnp.float32)

    # Reference computed first (kernel output may alias its own input buffer).
    ref = jnp.maximum(x77, 0.0)

    x78 = relu_pallas(x77)
    jax.block_until_ready(x78)

    assert x78.shape == ref.shape and x78.dtype == ref.dtype
    assert bool(jnp.allclose(x78, ref))

    print("KERNEL_OK")
</pallas_src>

<mosaic_0001>
module attributes {stable_mosaic.version = 11 : i64} {
  func.func @_relu_kernel(%arg0: i32, %arg1: memref<122x784xf32, #tpu.memory_space<vmem>>, %arg2: memref<122x784xf32, #tpu.memory_space<vmem>>) attributes {dimension_semantics = [#tpu.dimension_semantics<arbitrary>], iteration_bounds = array<i64: 1>, scalar_prefetch = 0 : i64, scratch_operands = 0 : i64, tpu.core_type = #tpu.core_type<tc>, window_params = [{pipeline_mode = #tpu.pipeline_mode<synchronous>, transform_indices = @transform_0, window_bounds = array<i64: 122, 784>}, {pipeline_mode = #tpu.pipeline_mode<synchronous>, transform_indices = @transform_1, window_bounds = array<i64: 122, 784>}]} {
    %c0 = arith.constant 0 : index
    %c0_0 = arith.constant 0 : index
    %0 = vector.load %arg1[%c0, %c0_0] : memref<122x784xf32, #tpu.memory_space<vmem>>, vector<122x784xf32>
    %cst = arith.constant 0.000000e+00 : f32
    %1 = vector.broadcast %cst : f32 to vector<122x784xf32>
    %2 = arith.maximumf %0, %1 : vector<122x784xf32>
    %c0_1 = arith.constant 0 : index
    %c0_2 = arith.constant 0 : index
    %3 = vector.load %arg2[%c0_1, %c0_2] : memref<122x784xf32, #tpu.memory_space<vmem>>, vector<122x784xf32>
    tpu.vector_store %arg2[%c0_1, %c0_2], %2 {strides = array<i32>} : memref<122x784xf32, #tpu.memory_space<vmem>>, vector<122x784xf32>,
    return
  }
  func.func @transform_0(%arg0: i32) -> (i32, i32) {
    %c0_i32 = arith.constant 0 : i32
    %c0_i32_0 = arith.constant 0 : i32
    %c0_i32_1 = arith.constant 0 : i32
    return %c0_i32, %c0_i32_0 : i32, i32
  }
  func.func @transform_1(%arg0: i32) -> (i32, i32) {
    %c0_i32 = arith.constant 0 : i32
    %c0_i32_0 = arith.constant 0 : i32
    %c0_i32_1 = arith.constant 0 : i32
    return %c0_i32, %c0_i32_0 : i32, i32
  }
}

</mosaic_0001>

<llo_original>
// kernel: relu_pallas.1
$region0: #{relu_pallas.1}
  #allocation0 [shape = 'u32[]', space=smem, size = 0x4, offset = 0x4, fixed_abs, tag = 'smem constant byte address 0x4 - core index']
  #allocation1 [shape = 'u32[144,128]{1,0:T(1,128)}', space=vmem, size = 0x12000, scoped, tag = 'internal scratch']
  %s0 = inlined_call_operand.vmem [shape: f32[122,784], index: 0, kind: input, shape index: {}, may-alias: {0,1}]
  %s1 = inlined_call_operand.vmem [shape: f32[122,784], index: 1, kind: output, shape index: {}, may-alias: {0,1}]
  %s2 = sld [smem:[#allocation0]]
  $region14: #{relu_pallas.1} parent=0
    _
  %s4 = ssub.s32 1, %s2
  %s5 = scalar_select 0, %s4, %s2
  // Predicated region
  $region2: #{relu_pallas.1} parent=0 // pred_check
    _
  $region3: #{relu_pallas.1} parent=0 // pred_check_branch
    %7 = sbr.rel (0) target = $region5
  $region4: #{relu_pallas.1} parent=0 // pred_region
    _
  $region5: #{relu_pallas.1} parent=0 // pred_fallthru
    _
  %v8 = vld [vmem:[%s0] sm:$0xff]
  %v9 = vld [vmem:[%s0 + $0x8] sm:$0xff]
  %v10 = vld [vmem:[%s0 + $0x10] sm:$0xff]
  %v11 = vld [vmem:[%s0 + $0x18] sm:$0xff]
  %v12 = vld [vmem:[%s0 + $0x20] sm:$0xff]
  %v13 = vld [vmem:[%s0 + $0x28] sm:$0xff]
  %v14 = vld [vmem:[%s0 + $0x30] sm:$0xff]
  %v15 = vld [vmem:[%s0 + $0x38] sm:$0xff]
  %v16 = vld [vmem:[%s0 + $0x40] sm:$0xff]
  %v17 = vld [vmem:[%s0 + $0x48] sm:$0xff]
  %v18 = vld [vmem:[%s0 + $0x50] sm:$0xff]
  %v19 = vld [vmem:[%s0 + $0x58] sm:$0xff]
  %v20 = vld [vmem:[%s0 + $0x60] sm:$0xff]
  %v21 = vld [vmem:[%s0 + $0x68] sm:$0xff]
  %v22 = vld [vmem:[%s0 + $0x70] sm:$0xff]
  %v23 = vld [vmem:[%s0 + $0x78] sm:$0xff]
  %v24 = vld [vmem:[%s0 + $0x80] sm:$0xff]
  %v25 = vld [vmem:[%s0 + $0x88] sm:$0xff]
  %v26 = vld [vmem:[%s0 + $0x90] sm:$0xff]
  %v27 = vld [vmem:[%s0 + $0x98] sm:$0xff]
  %v28 = vld [vmem:[%s0 + $0xa0] sm:$0xff]
  %v29 = vld [vmem:[%s0 + $0xa8] sm:$0xff]
  %v30 = vld [vmem:[%s0 + $0xb0] sm:$0xff]
  %v31 = vld [vmem:[%s0 + $0xb8] sm:$0xff]
  %v32 = vld [vmem:[%s0 + $0xc0] sm:$0xff]
  %v33 = vld [vmem:[%s0 + $0xc8] sm:$0xff]
  %v34 = vld [vmem:[%s0 + $0xd0] sm:$0xff]
  %v35 = vld [vmem:[%s0 + $0xd8] sm:$0xff]
  %v36 = vld [vmem:[%s0 + $0xe0] sm:$0xff]
  %v37 = vld [vmem:[%s0 + $0xe8] sm:$0xff]
  %v38 = vld [vmem:[%s0 + $0xf0] sm:$0xff]
  %v39 = vld [vmem:[%s0 + $0xf8] sm:$0xff]
  %v40 = vld [vmem:[%s0 + $0x100] sm:$0xff]
  %v41 = vld [vmem:[%s0 + $0x108] sm:$0xff]
  %v42 = vld [vmem:[%s0 + $0x110] sm:$0xff]
  %v43 = vld [vmem:[%s0 + $0x118] sm:$0xff]
  %v44 = vld [vmem:[%s0 + $0x120] sm:$0xff]
  %v45 = vld [vmem:[%s0 + $0x128] sm:$0xff]
  %v46 = vld [vmem:[%s0 + $0x130] sm:$0xff]
  %v47 = vld [vmem:[%s0 + $0x138] sm:$0xff]
  %v48 = vld [vmem:[%s0 + $0x140] sm:$0xff]
  %v49 = vld [vmem:[%s0 + $0x148] sm:$0xff]
  %v50 = vld [vmem:[%s0 + $0x150] sm:$0xff]
  %v51 = vld [vmem:[%s0 + $0x158] sm:$0xff]
  %v52 = vld [vmem:[%s0 + $0x160] sm:$0xff]
  %v53 = vld [vmem:[%s0 + $0x168] sm:$0xff]
  %v54 = vld [vmem:[%s0 + $0x170] sm:$0xff]
  %v55 = vld [vmem:[%s0 + $0x178] sm:$0xff]
  %v56 = vld [vmem:[%s0 + $0x180] sm:$0xff]
  %v57 = vld [vmem:[%s0 + $0x188] sm:$0xff]
  %v58 = vld [vmem:[%s0 + $0x190] sm:$0xff]
  %v59 = vld [vmem:[%s0 + $0x198] sm:$0xff]
  %v60 = vld [vmem:[%s0 + $0x1a0] sm:$0xff]
  %v61 = vld [vmem:[%s0 + $0x1a8] sm:$0xff]
  %v62 = vld [vmem:[%s0 + $0x1b0] sm:$0xff]
  %v63 = vld [vmem:[%s0 + $0x1b8] sm:$0xff]
  %v64 = vld [vmem:[%s0 + $0x1c0] sm:$0xff]
  %v65 = vld [vmem:[%s0 + $0x1c8] sm:$0xff]
  %v66 = vld [vmem:[%s0 + $0x1d0] sm:$0xff]
  %v67 = vld [vmem:[%s0 + $0x1d8] sm:$0xff]
  %v68 = vld [vmem:[%s0 + $0x1e0] sm:$0xff]
  %v69 = vld [vmem:[%s0 + $0x1e8] sm:$0xff]
  %v70 = vld [vmem:[%s0 + $0x1f0] sm:$0xff]
  %v71 = vld [vmem:[%s0 + $0x1f8] sm:$0xff]
  %v72 = vld [vmem:[%s0 + $0x200] sm:$0xff]
  %v73 = vld [vmem:[%s0 + $0x208] sm:$0xff]
  %v74 = vld [vmem:[%s0 + $0x210] sm:$0xff]
  %v75 = vld [vmem:[%s0 + $0x218] sm:$0xff]
  %v76 = vld [vmem:[%s0 + $0x220] sm:$0xff]
  %v77 = vld [vmem:[%s0 + $0x228] sm:$0xff]
  %v78 = vld [vmem:[%s0 + $0x230] sm:$0xff]
  %v79 = vld [vmem:[%s0 + $0x238] sm:$0xff]
  %v80 = vld [vmem:[%s0 + $0x240] sm:$0xff]
  %v81 = vld [vmem:[%s0 + $0x248] sm:$0xff]
  %v82 = vld [vmem:[%s0 + $0x250] sm:$0xff]
  %v83 = vld [vmem:[%s0 + $0x258] sm:$0xff]
  %v84 = vld [vmem:[%s0 + $0x260] sm:$0xff]
  %v85 = vld [vmem:[%s0 + $0x268] sm:$0xff]
  %v86 = vld [vmem:[%s0 + $0x270] sm:$0xff]
  %v87 = vld [vmem:[%s0 + $0x278] sm:$0xff]
  %v88 = vld [vmem:[%s0 + $0x280] sm:$0xff]
  %v89 = vld [vmem:[%s0 + $0x288] sm:$0xff]
  %v90 = vld [vmem:[%s0 + $0x290] sm:$0xff]
  %v91 = vld [vmem:[%s0 + $0x298] sm:$0xff]
  %v92 = vld [vmem:[%s0 + $0x2a0] sm:$0xff]
  %v93 = vld [vmem:[%s0 + $0x2a8] sm:$0xff]
  %v94 = vld [vmem:[%s0 + $0x2b0] sm:$0xff]
  %v95 = vld [vmem:[%s0 + $0x2b8] sm:$0xff]
  %v96 = vld [vmem:[%s0 + $0x2c0] sm:$0xff]
  %v97 = vld [vmem:[%s0 + $0x2c8] sm:$0xff]
  %v98 = vld [vmem:[%s0 + $0x2d0] sm:$0xff]
  %v99 = vld [vmem:[%s0 + $0x2d8] sm:$0xff]
  %v100 = vld [vmem:[%s0 + $0x2e0] sm:$0xff]
  %v101 = vld [vmem:[%s0 + $0x2e8] sm:$0xff]
  %v102 = vld [vmem:[%s0 + $0x2f0] sm:$0xff]
  %v103 = vld [vmem:[%s0 + $0x2f8] sm:$0xff]
  %v104 = vld [vmem:[%s0 + $0x300] sm:$0xff]
  %v105 = vld [vmem:[%s0 + $0x308] sm:$0xff]
  %v106 = vld [vmem:[%s0 + $0x310] sm:$0xff]
  %v107 = vld [vmem:[%s0 + $0x318] sm:$0xff]
  %v108 = vld [vmem:[%s0 + $0x320] sm:$0xff]
  %v109 = vld [vmem:[%s0 + $0x328] sm:$0xff]
  %v110 = vld [vmem:[%s0 + $0x330] sm:$0xff]
  %v111 = vld [vmem:[%s0 + $0x338] sm:$0xff]
  %v112 = vld [vmem:[%s0 + $0x340] sm:$0xff]
  %v113 = vld [vmem:[%s0 + $0x348] sm:$0x3]
  %v114 = vld [vmem:[%s0 + $0x350] sm:$0x3]
  %v115 = vld [vmem:[%s0 + $0x358] sm:$0x3]
  %v116 = vld [vmem:[%s0 + $0x360] sm:$0x3]
  %v117 = vld [vmem:[%s0 + $0x368] sm:$0x3]
  %v118 = vld [vmem:[%s0 + $0x370] sm:$0x3]
  %v119 = vld [vmem:[%s0 + $0x378] sm:$0x3]
  %v120 = vmax.f32 %v8, 0.0
  %v121 = vmax.f32 %v9, 0.0
  %v122 = vmax.f32 %v10, 0.0
  %v123 = vmax.f32 %v11, 0.0
  %v124 = vmax.f32 %v12, 0.0
  %v125 = vmax.f32 %v13, 0.0
  %v126 = vmax.f32 %v14, 0.0
  %v127 = vmax.f32 %v15, 0.0
  %v128 = vmax.f32 %v16, 0.0
  %v129 = vmax.f32 %v17, 0.0
  %v130 = vmax.f32 %v18, 0.0
  %v131 = vmax.f32 %v19, 0.0
  %v132 = vmax.f32 %v20, 0.0
  %v133 = vmax.f32 %v21, 0.0
  %v134 = vmax.f32 %v22, 0.0
  %v135 = vmax.f32 %v23, 0.0
  %v136 = vmax.f32 %v24, 0.0
  %v137 = vmax.f32 %v25, 0.0
  %v138 = vmax.f32 %v26, 0.0
  %v139 = vmax.f32 %v27, 0.0
  %v140 = vmax.f32 %v28, 0.0
  %v141 = vmax.f32 %v29, 0.0
  %v142 = vmax.f32 %v30, 0.0
  %v143 = vmax.f32 %v31, 0.0
  %v144 = vmax.f32 %v32, 0.0
  %v145 = vmax.f32 %v33, 0.0
  %v146 = vmax.f32 %v34, 0.0
  %v147 = vmax.f32 %v35, 0.0
  %v148 = vmax.f32 %v36, 0.0
  %v149 = vmax.f32 %v37, 0.0
  %v150 = vmax.f32 %v38, 0.0
  %v151 = vmax.f32 %v39, 0.0
  %v152 = vmax.f32 %v40, 0.0
  %v153 = vmax.f32 %v41, 0.0
  %v154 = vmax.f32 %v42, 0.0
  %v155 = vmax.f32 %v43, 0.0
  %v156 = vmax.f32 %v44, 0.0
  %v157 = vmax.f32 %v45, 0.0
  %v158 = vmax.f32 %v46, 0.0
  %v159 = vmax.f32 %v47, 0.0
  %v160 = vmax.f32 %v48, 0.0
  %v161 = vmax.f32 %v49, 0.0
  %v162 = vmax.f32 %v50, 0.0
  %v163 = vmax.f32 %v51, 0.0
  %v164 = vmax.f32 %v52, 0.0
  %v165 = vmax.f32 %v53, 0.0
  %v166 = vmax.f32 %v54, 0.0
  %v167 = vmax.f32 %v55, 0.0
  %v168 = vmax.f32 %v56, 0.0
  %v169 = vmax.f32 %v57, 0.0
  %v170 = vmax.f32 %v58, 0.0
  %v171 = vmax.f32 %v59, 0.0
  %v172 = vmax.f32 %v60, 0.0
  %v173 = vmax.f32 %v61, 0.0
  %v174 = vmax.f32 %v62, 0.0
  %v175 = vmax.f32 %v63, 0.0
  %v176 = vmax.f32 %v64, 0.0
  %v177 = vmax.f32 %v65, 0.0
  %v178 = vmax.f32 %v66, 0.0
  %v179 = vmax.f32 %v67, 0.0
  %v180 = vmax.f32 %v68, 0.0
  %v181 = vmax.f32 %v69, 0.0
  %v182 = vmax.f32 %v70, 0.0
  %v183 = vmax.f32 %v71, 0.0
  %v184 = vmax.f32 %v72, 0.0
  %v185 = vmax.f32 %v73, 0.0
  %v186 = vmax.f32 %v74, 0.0
  %v187 = vmax.f32 %v75, 0.0
  %v188 = vmax.f32 %v76, 0.0
  %v189 = vmax.f32 %v77, 0.0
  %v190 = vmax.f32 %v78, 0.0
  %v191 = vmax.f32 %v79, 0.0
  %v192 = vmax.f32 %v80, 0.0
  %v193 = vmax.f32 %v81, 0.0
  %v194 = vmax.f32 %v82, 0.0
  %v195 = vmax.f32 %v83, 0.0
  %v196 = vmax.f32 %v84, 0.0
  %v197 = vmax.f32 %v85, 0.0
  %v198 = vmax.f32 %v86, 0.0
  %v199 = vmax.f32 %v87, 0.0
  %v200 = vmax.f32 %v88, 0.0
  %v201 = vmax.f32 %v89, 0.0
  %v202 = vmax.f32 %v90, 0.0
  %v203 = vmax.f32 %v91, 0.0
  %v204 = vmax.f32 %v92, 0.0
  %v205 = vmax.f32 %v93, 0.0
  %v206 = vmax.f32 %v94, 0.0
  %v207 = vmax.f32 %v95, 0.0
  %v208 = vmax.f32 %v96, 0.0
  %v209 = vmax.f32 %v97, 0.0
  %v210 = vmax.f32 %v98, 0.0
  %v211 = vmax.f32 %v99, 0.0
  %v212 = vmax.f32 %v100, 0.0
  %v213 = vmax.f32 %v101, 0.0
  %v214 = vmax.f32 %v102, 0.0
  %v215 = vmax.f32 %v103, 0.0
  %v216 = vmax.f32 %v104, 0.0
  %v217 = vmax.f32 %v105, 0.0
  %v218 = vmax.f32 %v106, 0.0
  %v219 = vmax.f32 %v107, 0.0
  %v220 = vmax.f32 %v108, 0.0
  %v221 = vmax.f32 %v109, 0.0
  %v222 = vmax.f32 %v110, 0.0
  %v223 = vmax.f32 %v111, 0.0
  %v224 = vmax.f32 %v112, 0.0
  %v225 = vmax.f32 %v113, 0.0
  %v226 = vmax.f32 %v114, 0.0
  %v227 = vmax.f32 %v115, 0.0
  %v228 = vmax.f32 %v116, 0.0
  %v229 = vmax.f32 %v117, 0.0
  %v230 = vmax.f32 %v118, 0.0
  %v231 = vmax.f32 %v119, 0.0
  %232 = vst [vmem:[%s1] sm:$0xff] %v120
  %233 = vst [vmem:[%s1 + $0x8] sm:$0xff] %v121
  %234 = vst [vmem:[%s1 + $0x10] sm:$0xff] %v122
  %235 = vst [vmem:[%s1 + $0x18] sm:$0xff] %v123
  %236 = vst [vmem:[%s1 + $0x20] sm:$0xff] %v124
  %237 = vst [vmem:[%s1 + $0x28] sm:$0xff] %v125
  %vm238 = vcmask 130048
  %239 = vst.msk [vmem:[%s1 + $0x30] sm:$0xff] %vm238, %v126
  %240 = vst [vmem:[%s1 + $0x38] sm:$0xff] %v127
  %241 = vst [vmem:[%s1 + $0x40] sm:$0xff] %v128
  %242 = vst [vmem:[%s1 + $0x48] sm:$0xff] %v129
  %243 = vst [vmem:[%s1 + $0x50] sm:$0xff] %v130
  %244 = vst [vmem:[%s1 + $0x58] sm:$0xff] %v131
  %245 = vst [vmem:[%s1 + $0x60] sm:$0xff] %v132
  %246 = vst.msk [vmem:[%s1 + $0x68] sm:$0xff] %vm238, %v133
  %247 = vst [vmem:[%s1 + $0x70] sm:$0xff] %v134
  %248 = vst [vmem:[%s1 + $0x78] sm:$0xff] %v135
  %249 = vst [vmem:[%s1 + $0x80] sm:$0xff] %v136
  %250 = vst [vmem:[%s1 + $0x88] sm:$0xff] %v137
  %251 = vst [vmem:[%s1 + $0x90] sm:$0xff] %v138
  %252 = vst [vmem:[%s1 + $0x98] sm:$0xff] %v139
  %253 = vst.msk [vmem:[%s1 + $0xa0] sm:$0xff] %vm238, %v140
  %254 = vst [vmem:[%s1 + $0xa8] sm:$0xff] %v141
  %255 = vst [vmem:[%s1 + $0xb0] sm:$0xff] %v142
  %256 = vst [vmem:[%s1 + $0xb8] sm:$0xff] %v143
  %257 = vst [vmem:[%s1 + $0xc0] sm:$0xff] %v144
  %258 = vst [vmem:[%s1 + $0xc8] sm:$0xff] %v145
  %259 = vst [vmem:[%s1 + $0xd0] sm:$0xff] %v146
  %260 = vst.msk [vmem:[%s1 + $0xd8] sm:$0xff] %vm238, %v147
  %261 = vst [vmem:[%s1 + $0xe0] sm:$0xff] %v148
  %262 = vst [vmem:[%s1 + $0xe8] sm:$0xff] %v149
  %263 = vst [vmem:[%s1 + $0xf0] sm:$0xff] %v150
  %264 = vst [vmem:[%s1 + $0xf8] sm:$0xff] %v151
  %265 = vst [vmem:[%s1 + $0x100] sm:$0xff] %v152
  %266 = vst [vmem:[%s1 + $0x108] sm:$0xff] %v153
  %267 = vst.msk [vmem:[%s1 + $0x110] sm:$0xff] %vm238, %v154
  %268 = vst [vmem:[%s1 + $0x118] sm:$0xff] %v155
  %269 = vst [vmem:[%s1 + $0x120] sm:$0xff] %v156
  %270 = vst [vmem:[%s1 + $0x128] sm:$0xff] %v157
  %271 = vst [vmem:[%s1 + $0x130] sm:$0xff] %v158
  %272 = vst [vmem:[%s1 + $0x138] sm:$0xff] %v159
  %273 = vst [vmem:[%s1 + $0x140] sm:$0xff] %v160
  %274 = vst.msk [vmem:[%s1 + $0x148] sm:$0xff] %vm238, %v161
  %275 = vst [vmem:[%s1 + $0x150] sm:$0xff] %v162
  %276 = vst [vmem:[%s1 + $0x158] sm:$0xff] %v163
  %277 = vst [vmem:[%s1 + $0x160] sm:$0xff] %v164
  %278 = vst [vmem:[%s1 + $0x168] sm:$0xff] %v165
  %279 = vst [vmem:[%s1 + $0x170] sm:$0xff] %v166
  %280 = vst [vmem:[%s1 + $0x178] sm:$0xff] %v167
  %281 = vst.msk [vmem:[%s1 + $0x180] sm:$0xff] %vm238, %v168
  %282 = vst [vmem:[%s1 + $0x188] sm:$0xff] %v169
  %283 = vst [vmem:[%s1 + $0x190] sm:$0xff] %v170
  %284 = vst [vmem:[%s1 + $0x198] sm:$0xff] %v171
  %285 = vst [vmem:[%s1 + $0x1a0] sm:$0xff] %v172
  %286 = vst [vmem:[%s1 + $0x1a8] sm:$0xff] %v173
  %287 = vst [vmem:[%s1 + $0x1b0] sm:$0xff] %v174
  %288 = vst.msk [vmem:[%s1 + $0x1b8] sm:$0xff] %vm238, %v175
  %289 = vst [vmem:[%s1 + $0x1c0] sm:$0xff] %v176
  %290 = vst [vmem:[%s1 + $0x1c8] sm:$0xff] %v177
  %291 = vst [vmem:[%s1 + $0x1d0] sm:$0xff] %v178
  %292 = vst [vmem:[%s1 + $0x1d8] sm:$0xff] %v179
  %293 = vst [vmem:[%s1 + $0x1e0] sm:$0xff] %v180
  %294 = vst [vmem:[%s1 + $0x1e8] sm:$0xff] %v181
  %295 = vst.msk [vmem:[%s1 + $0x1f0] sm:$0xff] %vm238, %v182
  %296 = vst [vmem:[%s1 + $0x1f8] sm:$0xff] %v183
  %297 = vst [vmem:[%s1 + $0x200] sm:$0xff] %v184
  %298 = vst [vmem:[%s1 + $0x208] sm:$0xff] %v185
  %299 = vst [vmem:[%s1 + $0x210] sm:$0xff] %v186
  %300 = vst [vmem:[%s1 + $0x218] sm:$0xff] %v187
  %301 = vst [vmem:[%s1 + $0x220] sm:$0xff] %v188
  %302 = vst.msk [vmem:[%s1 + $0x228] sm:$0xff] %vm238, %v189
  %303 = vst [vmem:[%s1 + $0x230] sm:$0xff] %v190
  %304 = vst [vmem:[%s1 + $0x238] sm:$0xff] %v191
  %305 = vst [vmem:[%s1 + $0x240] sm:$0xff] %v192
  %306 = vst [vmem:[%s1 + $0x248] sm:$0xff] %v193
  %307 = vst [vmem:[%s1 + $0x250] sm:$0xff] %v194
  %308 = vst [vmem:[%s1 + $0x258] sm:$0xff] %v195
  %309 = vst.msk [vmem:[%s1 + $0x260] sm:$0xff] %vm238, %v196
  %310 = vst [vmem:[%s1 + $0x268] sm:$0xff] %v197
  %311 = vst [vmem:[%s1 + $0x270] sm:$0xff] %v198
  %312 = vst [vmem:[%s1 + $0x278] sm:$0xff] %v199
  %313 = vst [vmem:[%s1 + $0x280] sm:$0xff] %v200
  %314 = vst [vmem:[%s1 + $0x288] sm:$0xff] %v201
  %315 = vst [vmem:[%s1 + $0x290] sm:$0xff] %v202
  %316 = vst.msk [vmem:[%s1 + $0x298] sm:$0xff] %vm238, %v203
  %317 = vst [vmem:[%s1 + $0x2a0] sm:$0xff] %v204
  %318 = vst [vmem:[%s1 + $0x2a8] sm:$0xff] %v205
  %319 = vst [vmem:[%s1 + $0x2b0] sm:$0xff] %v206
  %320 = vst [vmem:[%s1 + $0x2b8] sm:$0xff] %v207
  %321 = vst [vmem:[%s1 + $0x2c0] sm:$0xff] %v208
  %322 = vst [vmem:[%s1 + $0x2c8] sm:$0xff] %v209
  %323 = vst.msk [vmem:[%s1 + $0x2d0] sm:$0xff] %vm238, %v210
  %324 = vst [vmem:[%s1 + $0x2d8] sm:$0xff] %v211
  %325 = vst [vmem:[%s1 + $0x2e0] sm:$0xff] %v212
  %326 = vst [vmem:[%s1 + $0x2e8] sm:$0xff] %v213
  %327 = vst [vmem:[%s1 + $0x2f0] sm:$0xff] %v214
  %328 = vst [vmem:[%s1 + $0x2f8] sm:$0xff] %v215
  %329 = vst [vmem:[%s1 + $0x300] sm:$0xff] %v216
  %330 = vst.msk [vmem:[%s1 + $0x308] sm:$0xff] %vm238, %v217
  %331 = vst [vmem:[%s1 + $0x310] sm:$0xff] %v218
  %332 = vst [vmem:[%s1 + $0x318] sm:$0xff] %v219
  %333 = vst [vmem:[%s1 + $0x320] sm:$0xff] %v220
  %334 = vst [vmem:[%s1 + $0x328] sm:$0xff] %v221
  %335 = vst [vmem:[%s1 + $0x330] sm:$0xff] %v222
  %336 = vst [vmem:[%s1 + $0x338] sm:$0xff] %v223
  %337 = vst.msk [vmem:[%s1 + $0x340] sm:$0xff] %vm238, %v224
  %338 = vst [vmem:[%s1 + $0x348] sm:$0x3] %v225
  %339 = vst [vmem:[%s1 + $0x350] sm:$0x3] %v226
  %340 = vst [vmem:[%s1 + $0x358] sm:$0x3] %v227
  %341 = vst [vmem:[%s1 + $0x360] sm:$0x3] %v228
  %342 = vst [vmem:[%s1 + $0x368] sm:$0x3] %v229
  %343 = vst [vmem:[%s1 + $0x370] sm:$0x3] %v230
  %vm344 = vcmask 123904
  %345 = vst.msk [vmem:[%s1 + $0x378] sm:$0x3] %vm344, %v231
  // Predicated region
  $region6: #{relu_pallas.1} parent=0 // pred_check
    _
  $region7: #{relu_pallas.1} parent=0 // pred_check_branch
    %347 = sbr.rel (0) target = $region9
  $region8: #{relu_pallas.1} parent=0 // pred_region
    _
  $region9: #{relu_pallas.1} parent=0 // pred_fallthru
    _
  // Predicated region
  $region10: #{relu_pallas.1} parent=0 // pred_check
    _
  $region11: #{relu_pallas.1} parent=0 // pred_check_branch
    %349 = sbr.rel (0) target = $region13
  $region12: #{relu_pallas.1} parent=0 // pred_region
    _
  $region13: #{relu_pallas.1} parent=0 // pred_fallthru
    _

</llo_original>
